<compile_context>
chip_gen: v7x
topology: tpu7x:2x2x1
jax: 0.10.0
libtpu: 0.0.40
codegen_flags: <defaults>
</compile_context>

<pallas_src>
import jax
import jax.numpy as jnp
from jax.experimental import pallas as pl
from jax.experimental.pallas import tpu as pltpu


def _round_up(a, b):
    return (a + b - 1) // b * b


def fc2_kernel(x_ref, w1_ref, b1_ref, w2_ref, b2_ref, o_ref):
    """o = relu(x @ W1 + b1) @ W2 + b2 on one row tile; weights stay resident."""
    x = x_ref[...].astype(w1_ref.dtype)          # VMEM-side cast; no-op if bf16
    z = jnp.dot(x, w1_ref[...], preferred_element_type=jnp.float32)
    z = jnp.maximum(z + b1_ref[...], 0.0)
    y = jnp.dot(z.astype(w2_ref.dtype), w2_ref[...],
                preferred_element_type=jnp.float32)
    o_ref[...] = (y + b2_ref[...]).astype(o_ref.dtype)


def _choose_tm(M, per_row_bytes, weight_bytes, budget_bytes, tm_cap=8192):
    avail = max(budget_bytes - weight_bytes, 1 << 19)
    tm = min(int(avail // max(per_row_bytes, 1)), tm_cap)
    # Keep >= ~8 grid steps on large problems so the ("parallel",) axis can be
    # sharded across v7x's two TensorCores and the DMA pipeline stays deep.
    tm = min(tm, max(512, _round_up(pl.cdiv(M, 8), 8)))
    return max(8, tm)


def fc2_mlp_pallas(xf, w1, b1, w2, b2, *, out_dtype=None, tm=None,
                   vmem_budget_bytes=24 * 1024 * 1024, x_buffer_count=None):
    """xf: [M, K] -> [M, Np] via Linear -> ReLU -> Linear (weights [in, out]).

    Weights/biases are kept resident in VMEM (constant index_map); x tiles are
    streamed.  No padding of M: the grid uses pl.cdiv and Pallas clips the
    ragged last block (rows are independent, so this is exact).
    """
    M, K = xf.shape
    Hp = w1.shape[1]
    Np = w2.shape[1]
    if out_dtype is None:
        out_dtype = xf.dtype

    x_item = jnp.dtype(xf.dtype).itemsize
    w_item = jnp.dtype(w1.dtype).itemsize
    o_item = jnp.dtype(out_dtype).itemsize
    n_xbuf = 2 if x_buffer_count is None else int(x_buffer_count)
    # double-buffered x & y tiles + f32 z / y intermediates + bf16 z cast
    per_row = n_xbuf * K * x_item + 2 * Np * o_item + Hp * (4 + w_item) + Np * 4
    weight_bytes = (K * Hp + Hp * Np) * w_item + (Hp + Np) * 4

    if tm is None:
        tm = _choose_tm(M, per_row, weight_bytes, vmem_budget_bytes)
    tm = int(tm)
    if tm >= M:
        tm = M                       # full-extent row block (always legal)
    else:
        tm = max(8, (tm // 8) * 8)   # sublane-aligned row tile

    if x_buffer_count is None:
        x_spec = pl.BlockSpec((tm, K), lambda i: (i, 0))
    else:
        # Deeper prefetch if the x DMA is still exposed after tm tuning.
        x_spec = pl.BlockSpec((tm, K), lambda i: (i, 0),
                              pipeline_mode=pl.Buffered(int(x_buffer_count)))

    grid = (pl.cdiv(M, tm),)         # ragged tail handled by block clipping

    return pl.pallas_call(
        fc2_kernel,
        out_shape=jax.ShapeDtypeStruct((M, Np), out_dtype),
        grid_spec=pltpu.PrefetchScalarGridSpec(
            num_scalar_prefetch=0,
            grid=grid,
            in_specs=[
                x_spec,                                    # x tile  (streamed)
                pl.BlockSpec((K, Hp), lambda i: (0, 0)),   # W1e     (resident)
                pl.BlockSpec((1, Hp), lambda i: (0, 0)),   # b1e f32 (resident)
                pl.BlockSpec((Hp, Np), lambda i: (0, 0)),  # W2e     (resident)
                pl.BlockSpec((1, Np), lambda i: (0, 0)),   # b2e f32 (resident)
            ],
            out_specs=pl.BlockSpec((tm, Np), lambda i: (i, 0)),
        ),
        compiler_params=pltpu.CompilerParams(
            dimension_semantics=("parallel",),
            vmem_limit_bytes=32 * 1024 * 1024),
    )(xf, w1, b1, w2, b2)


def make_fc2_encoder(w1, b1, w2, b2, n_vars, *, compute_dtype=jnp.bfloat16,
                     lane_multiple=128):
    """Expand W_P1/W_P2 ONCE into lane-padded transpose-free parameters.

    w1: [patch_len, d_model] (= W_P1.weight.T),  b1: [d_model]
    w2: [d_model,  d_model]  (= W_P2.weight.T),  b2: [d_model]
    Returns (params, apply_fn) with apply_fn(params, x, *, tm=None).
    """
    patch_len, d_model = w1.shape
    n_out = d_model * n_vars
    n_pad = _round_up(n_out, lane_multiple)

    eye = jnp.eye(n_vars, dtype=jnp.float32)
    w1e = jnp.kron(w1.astype(jnp.float32), eye)                   # [K, n_out]
    w2e = jnp.kron(w2.astype(jnp.float32), eye)                   # [n_out, n_out]
    b1e = jnp.repeat(b1.reshape(-1).astype(jnp.float32), n_vars)[None, :]
    b2e = jnp.repeat(b2.reshape(-1).astype(jnp.float32), n_vars)[None, :]
    if n_pad != n_out:
        pad = n_pad - n_out
        # Zero-pad hidden & output lanes to a 128 multiple -> unmasked stores.
        w1e = jnp.pad(w1e, ((0, 0), (0, pad)))
        w2e = jnp.pad(w2e, ((0, pad), (0, pad)))
        b1e = jnp.pad(b1e, ((0, 0), (0, pad)))
        b2e = jnp.pad(b2e, ((0, 0), (0, pad)))

    # Weights streamed in compute_dtype (bf16 by default); biases stay f32.
    params = (w1e.astype(compute_dtype), b1e, w2e.astype(compute_dtype), b2e)

    # TODO(synk): for large n_vars the kron expansion inflates FLOPs n_vars x and
    # W2e bytes n_vars^2 x; past the VMEM/MXU budget, switch to a per-tile
    # 'mkv,kd->mvd' dot_general + XLU minor-dim transpose instead.

    def apply(params, x, *, tm=None):
        """x: [bs, num_patch, patch_len, n_vars] -> [bs, num_patch, d_model, n_vars].

        Pass x already in bf16 to halve streamed HBM bytes; casting f32->bf16
        in the wrapper would add an extra HBM pass, so the wrapper keeps x's
        dtype and the kernel casts the tile in VMEM instead.
        """
        w1e_, b1e_, w2e_, b2e_ = params
        bs, num_patch, plen, nv = x.shape
        assert plen == patch_len and nv == n_vars
        xf = x.reshape(bs * num_patch, plen * nv)        # free row-major view
        yf = fc2_mlp_pallas(xf, w1e_, b1e_, w2e_, b2e_, out_dtype=x.dtype, tm=tm)
        if n_pad != n_out:
            yf = yf[:, :n_out]                           # drop lane padding
        return yf.reshape(bs, num_patch, d_model, nv)    # free row-major view

    return params, apply


def reference(x, w1, b1, w2, b2):
    """Direct transcription of the PyTorch forward (f32)."""
    xp = jnp.transpose(x, (0, 3, 1, 2)).astype(jnp.float32)
    z = jnp.maximum(xp @ w1.astype(jnp.float32)
                    + b1.reshape(-1).astype(jnp.float32), 0.0)
    y = z @ w2.astype(jnp.float32) + b2.reshape(-1).astype(jnp.float32)
    y = jnp.swapaxes(y, 1, 2)                 # transpose(1,2)
    return jnp.transpose(y, (0, 1, 3, 2))     # permute(0,1,3,2)


if __name__ == "__main__":
    key = jax.random.PRNGKey(0)
    k = jax.random.split(key, 10)

    # ---- Test 1: small shapes, f32 compute, single grid step ---------------
    bs, num_patch, patch_len, n_vars, d_model = 2, 8, 16, 4, 32
    x = jax.random.normal(k[0], (bs, num_patch, patch_len, n_vars), jnp.float32)
    w1 = jax.random.normal(k[1], (patch_len, d_model), jnp.float32) / jnp.sqrt(patch_len)
    b1 = jax.random.normal(k[2], (d_model,), jnp.float32) * 0.1
    w2 = jax.random.normal(k[3], (d_model, d_model), jnp.float32) / jnp.sqrt(d_model)
    b2 = jax.random.normal(k[4], (d_model,), jnp.float32) * 0.1

    params32, apply32 = make_fc2_encoder(w1, b1, w2, b2, n_vars,
                                         compute_dtype=jnp.float32)
    fwd32 = jax.jit(apply32, static_argnames=("tm",))
    out = jax.block_until_ready(fwd32(params32, x))
    ref = reference(x, w1, b1, w2, b2)
    assert out.shape == (bs, num_patch, d_model, n_vars), out.shape
    assert jnp.allclose(out, ref, atol=1e-2, rtol=1e-2), "f32 mismatch vs reference"

    # ---- Test 2: ragged M, multi-tile grid, bf16 streaming, lane padding ---
    bs, num_patch, patch_len, n_vars, d_model = 4, 50, 12, 7, 24
    x = jax.random.normal(k[5], (bs, num_patch, patch_len, n_vars), jnp.float32)
    w1 = jax.random.normal(k[6], (patch_len, d_model), jnp.float32) / jnp.sqrt(patch_len)
    b1 = jax.random.normal(k[7], (d_model,), jnp.float32) * 0.1
    w2 = jax.random.normal(k[8], (d_model, d_model), jnp.float32) / jnp.sqrt(d_model)
    b2 = jax.random.normal(k[9], (d_model,), jnp.float32) * 0.1

    x_bf16 = x.astype(jnp.bfloat16)           # activations arrive in bf16
    params_bf, apply_bf = make_fc2_encoder(w1, b1, w2, b2, n_vars,
                                           compute_dtype=jnp.bfloat16)
    fwd_bf = jax.jit(apply_bf, static_argnames=("tm",))

    # tm=64 forces multiple grid steps and a ragged tail (200 = 3*64 + 8).
    out2 = jax.block_until_ready(fwd_bf(params_bf, x_bf16, tm=64))
    assert out2.shape == (bs, num_patch, d_model, n_vars), out2.shape
    assert out2.dtype == jnp.bfloat16
    # Reference on the same bf16-rounded inputs (expected precision change from
    # bf16 streaming per the review, not a semantics change).
    ref2 = reference(x_bf16.astype(jnp.float32),
                     w1.astype(jnp.bfloat16).astype(jnp.float32), b1,
                     w2.astype(jnp.bfloat16).astype(jnp.float32), b2)
    assert jnp.allclose(out2.astype(jnp.float32), ref2, atol=5e-2, rtol=5e-2), \
        "bf16 tiled mismatch vs reference"

    # Auto tile-size path (VMEM-budget-derived tm, full-extent row block here).
    out3 = jax.block_until_ready(fwd_bf(params_bf, x_bf16))
    assert jnp.allclose(out3.astype(jnp.float32), ref2, atol=5e-2, rtol=5e-2), \
        "bf16 auto-tm mismatch vs reference"

    # TODO(synk): shared_embedding=False branch (per-variable nn.Linear list;
    # note the PyTorch code also discards the W_P2 output there) not implemented.
    print("KERNEL_OK")
</pallas_src>

<mosaic_0001>
module attributes {stable_mosaic.version = 11 : i64} {
  func.func @fc2_kernel(%arg0: i32, %arg1: memref<16x64xf32, #tpu.memory_space<vmem>>, %arg2: memref<64x128xf32, #tpu.memory_space<vmem>>, %arg3: memref<1x128xf32, #tpu.memory_space<vmem>>, %arg4: memref<128x128xf32, #tpu.memory_space<vmem>>, %arg5: memref<1x128xf32, #tpu.memory_space<vmem>>, %arg6: memref<16x128xf32, #tpu.memory_space<vmem>>) attributes {dimension_semantics = [#tpu.dimension_semantics<parallel>], iteration_bounds = array<i64: 1>, scalar_prefetch = 0 : i64, scratch_operands = 0 : i64, tpu.core_type = #tpu.core_type<tc>, window_params = [{transform_indices = @transform_0, window_bounds = array<i64: 16, 64>}, {pipeline_mode = #tpu.pipeline_mode<synchronous>, transform_indices = @transform_1, window_bounds = array<i64: 64, 128>}, {pipeline_mode = #tpu.pipeline_mode<synchronous>, transform_indices = @transform_2, window_bounds = array<i64: 1, 128>}, {pipeline_mode = #tpu.pipeline_mode<synchronous>, transform_indices = @transform_3, window_bounds = array<i64: 128, 128>}, {pipeline_mode = #tpu.pipeline_mode<synchronous>, transform_indices = @transform_4, window_bounds = array<i64: 1, 128>}, {transform_indices = @transform_5, window_bounds = array<i64: 16, 128>}]} {
    %c0 = arith.constant 0 : index
    %c0_0 = arith.constant 0 : index
    %0 = vector.load %arg1[%c0, %c0_0] : memref<16x64xf32, #tpu.memory_space<vmem>>, vector<16x64xf32>
    %c0_1 = arith.constant 0 : index
    %c0_2 = arith.constant 0 : index
    %1 = vector.load %arg2[%c0_1, %c0_2] : memref<64x128xf32, #tpu.memory_space<vmem>>, vector<64x128xf32>
    %cst = arith.constant dense<0.000000e+00> : vector<16x128xf32>
    %2 = tpu.matmul %0, %1, %cst {dimension_numbers = #tpu.dot_dimension_numbers<[1], [0], [0], [1], [0, 0, 1, 1], [], []>} : vector<16x64xf32>, vector<64x128xf32>, vector<16x128xf32> -> vector<16x128xf32>
    %c0_3 = arith.constant 0 : index
    %c0_4 = arith.constant 0 : index
    %3 = vector.load %arg3[%c0_3, %c0_4] : memref<1x128xf32, #tpu.memory_space<vmem>>, vector<1x128xf32>
    %4 = vector.broadcast %3 : vector<1x128xf32> to vector<16x128xf32>
    %5 = arith.addf %2, %4 : vector<16x128xf32>
    %cst_5 = arith.constant 0.000000e+00 : f32
    %6 = vector.broadcast %cst_5 : f32 to vector<16x128xf32>
    %7 = arith.maximumf %5, %6 : vector<16x128xf32>
    %c0_6 = arith.constant 0 : index
    %c0_7 = arith.constant 0 : index
    %8 = vector.load %arg4[%c0_6, %c0_7] : memref<128x128xf32, #tpu.memory_space<vmem>>, vector<128x128xf32>
    %cst_8 = arith.constant dense<0.000000e+00> : vector<16x128xf32>
    %9 = tpu.matmul %7, %8, %cst_8 {dimension_numbers = #tpu.dot_dimension_numbers<[1], [0], [0], [1], [0, 0, 1, 1], [], []>} : vector<16x128xf32>, vector<128x128xf32>, vector<16x128xf32> -> vector<16x128xf32>
    %c0_9 = arith.constant 0 : index
    %c0_10 = arith.constant 0 : index
    %10 = vector.load %arg5[%c0_9, %c0_10] : memref<1x128xf32, #tpu.memory_space<vmem>>, vector<1x128xf32>
    %11 = vector.broadcast %10 : vector<1x128xf32> to vector<16x128xf32>
    %12 = arith.addf %9, %11 : vector<16x128xf32>
    %c0_11 = arith.constant 0 : index
    %c0_12 = arith.constant 0 : index
    %13 = vector.load %arg6[%c0_11, %c0_12] : memref<16x128xf32, #tpu.memory_space<vmem>>, vector<16x128xf32>
    tpu.vector_store %arg6[%c0_11, %c0_12], %12 {strides = array<i32>} : memref<16x128xf32, #tpu.memory_space<vmem>>, vector<16x128xf32>,
    return
  }
  func.func @transform_0(%arg0: i32) -> (i32, i32) {
    %c0_i32 = arith.constant 0 : i32
    %c0_i32_0 = arith.constant 0 : i32
    return %arg0, %c0_i32 : i32, i32
  }
  func.func @transform_1(%arg0: i32) -> (i32, i32) {
    %c0_i32 = arith.constant 0 : i32
    %c0_i32_0 = arith.constant 0 : i32
    %c0_i32_1 = arith.constant 0 : i32
    return %c0_i32, %c0_i32_0 : i32, i32
  }
  func.func @transform_2(%arg0: i32) -> (i32, i32) {
    %c0_i32 = arith.constant 0 : i32
    %c0_i32_0 = arith.constant 0 : i32
    %c0_i32_1 = arith.constant 0 : i32
    return %c0_i32, %c0_i32_0 : i32, i32
  }
  func.func @transform_3(%arg0: i32) -> (i32, i32) {
    %c0_i32 = arith.constant 0 : i32
    %c0_i32_0 = arith.constant 0 : i32
    %c0_i32_1 = arith.constant 0 : i32
    return %c0_i32, %c0_i32_0 : i32, i32
  }
  func.func @transform_4(%arg0: i32) -> (i32, i32) {
    %c0_i32 = arith.constant 0 : i32
    %c0_i32_0 = arith.constant 0 : i32
    %c0_i32_1 = arith.constant 0 : i32
    return %c0_i32, %c0_i32_0 : i32, i32
  }
  func.func @transform_5(%arg0: i32) -> (i32, i32) {
    %c0_i32 = arith.constant 0 : i32
    %c0_i32_0 = arith.constant 0 : i32
    return %arg0, %c0_i32 : i32, i32
  }
}

</mosaic_0001>

<llo_original>
// kernel: apply.1
$region0: #{apply.1}
  #allocation0 [shape = 'u32[]', space=smem, size = 0x4, offset = 0x4, fixed_abs, tag = 'smem constant byte address 0x4 - core index']
  #allocation1 [shape = 'u32[144,128]{1,0:T(1,128)}', space=vmem, size = 0x12000, scoped, tag = 'internal scratch']
  %s0 = inlined_call_operand.vmem [shape: f32[16,64], index: 0, kind: input, shape index: {}]
  %s1 = inlined_call_operand.vmem [shape: f32[64,128], index: 1, kind: input, shape index: {}]
  %s2 = inlined_call_operand.vmem [shape: f32[1,128], index: 2, kind: input, shape index: {}]
  %s3 = inlined_call_operand.vmem [shape: f32[128,128], index: 3, kind: input, shape index: {}]
  %s4 = inlined_call_operand.vmem [shape: f32[1,128], index: 4, kind: input, shape index: {}]
  %s5 = inlined_call_operand.vmem [shape: f32[16,128], index: 5, kind: output, shape index: {}]
  %s6 = sld [smem:[#allocation0]]
  $region30: #{apply.1} parent=0
    _
  %s8 = ssub.s32 1, %s6
  %s9 = scalar_select 0, %s8, %s6
  // Predicated region
  $region2: #{apply.1} parent=0 // pred_check
    _
  $region3: #{apply.1} parent=0 // pred_check_branch
    %11 = sbr.rel (0) target = $region5
  $region4: #{apply.1} parent=0 // pred_region
    _
  $region5: #{apply.1} parent=0 // pred_fallthru
    _
  // Predicated region
  $region6: #{apply.1} parent=0 // pred_check
    _
  $region7: #{apply.1} parent=0 // pred_check_branch
    %13 = sbr.rel (0) target = $region9
  $region8: #{apply.1} parent=0 // pred_region
    _
  $region9: #{apply.1} parent=0 // pred_fallthru
    _
  // Predicated region
  $region10: #{apply.1} parent=0 // pred_check
    _
  $region11: #{apply.1} parent=0 // pred_check_branch
    %15 = sbr.rel (0) target = $region13
  $region12: #{apply.1} parent=0 // pred_region
    _
  $region13: #{apply.1} parent=0 // pred_fallthru
    _
  // Predicated region
  $region14: #{apply.1} parent=0 // pred_check
    _
  $region15: #{apply.1} parent=0 // pred_check_branch
    %17 = sbr.rel (0) target = $region17
  $region16: #{apply.1} parent=0 // pred_region
    _
  $region17: #{apply.1} parent=0 // pred_fallthru
    _
  // Predicated region
  $region18: #{apply.1} parent=0 // pred_check
    _
  $region19: #{apply.1} parent=0 // pred_check_branch
    %19 = sbr.rel (0) target = $region21
  $region20: #{apply.1} parent=0 // pred_region
    _
  $region21: #{apply.1} parent=0 // pred_fallthru
    _
  %v20 = vld [vmem:[%s0] sm:$0xff]
  %v21 = vld [vmem:[%s0 + $0x8] sm:$0xff]
  %v22 = vld [vmem:[%s1] sm:$0xff]
  %v23 = vld [vmem:[%s1 + $0x8] sm:$0xff]
  %v24 = vld [vmem:[%s1 + $0x10] sm:$0xff]
  %v25 = vld [vmem:[%s1 + $0x18] sm:$0xff]
  %v26 = vld [vmem:[%s1 + $0x20] sm:$0xff]
  %v27 = vld [vmem:[%s1 + $0x28] sm:$0xff]
  %v28 = vld [vmem:[%s1 + $0x30] sm:$0xff]
  %v29 = vld [vmem:[%s1 + $0x38] sm:$0xff]
  %v30 = vld [vmem:[%s2] sm:$0x1]
  %v32 = vlaneseq
  %v33 = vshrl.u32 %v32, 7
  %v34 = vsub.s32 0, %v33
  %v35 = vrot.slane %v30, %v34
  %vm37 = vcmask 523264
  %v39 = vsel %vm37, %v20, 0
  %v42 = vsel %vm37, %v21, 0
  %44 = vmatprep.subr.mxu0 0.0
  %45 = vmatpush1.msra.mxu0 %v22
  %46 = vmatprep.subr.mxu0 0.0
  %47 = vmatpush1.msra.mxu0 %v23
  %48 = vmatprep.subr.mxu0 0.0
  %49 = vmatpush1.msra.mxu0 %v24
  %50 = vmatprep.subr.mxu0 0.0
  %51 = vmatpush1.msra.mxu0 %v25
  %52 = vmatprep.subr.mxu0 0.0
  %53 = vmatpush1.msra.mxu0 %v26
  %54 = vmatprep.subr.mxu0 0.0
  %55 = vmatpush1.msra.mxu0 %v27
  %56 = vmatprep.subr.mxu0 0.0
  %57 = vmatpush1.msra.mxu0 %v28
  %58 = vmatprep.subr.mxu0 0.0
  %59 = vmatpush1.msra.mxu0 %v29
  %60 = vmatprep.subr.mxu0 0.0
  %61 = vmatpush1.msra.mxu0 0.0
  %62 = vmatprep.subr.mxu0 0.0
  %63 = vmatpush1.msra.mxu0 0.0
  %64 = vmatprep.subr.mxu0 0.0
  %65 = vmatpush1.msra.mxu0 0.0
  %66 = vmatprep.subr.mxu0 0.0
  %67 = vmatpush1.msra.mxu0 0.0
  %68 = vmatprep.subr.mxu0 0.0
  %69 = vmatpush1.msra.mxu0 0.0
  %70 = vmatprep.subr.mxu0 0.0
  %71 = vmatpush1.msra.mxu0 0.0
  %72 = vmatprep.subr.mxu0 0.0
  %73 = vmatpush1.msra.mxu0 0.0
  %74 = vmatprep.subr.mxu0 0.0
  %75 = vmatpush1.msra.mxu0 0.0
  %76 = vmatprep.subr.mxu0 0.0
  %77 = vmatpush1.msra.mxu0 0.0
  %78 = vmatprep.subr.mxu0 0.0
  %79 = vmatpush1.msra.mxu0 0.0
  %80 = vmatprep.subr.mxu0 0.0
  %81 = vmatpush1.msra.mxu0 0.0
  %82 = vmatprep.subr.mxu0 0.0
  %83 = vmatpush1.msra.mxu0 0.0
  %84 = vmatprep.subr.mxu0 0.0
  %85 = vmatpush1.msra.mxu0 0.0
  %86 = vmatprep.subr.mxu0 0.0
  %87 = vmatpush1.msra.mxu0 0.0
  %88 = vmatprep.subr.mxu0 0.0
  %89 = vmatpush1.msra.mxu0 0.0
  %90 = vmatprep.subr.mxu0 0.0
  %91 = vmatpush1.msra.mxu0 0.0
  %92 = vmatprep.subr.mxu0 0.0
  %93 = vmatpush1.msra.mxu0 0.0
  %94 = vmatprep.subr.mxu0 0.0
  %95 = vmatpush1.msra.mxu0 0.0
  %96 = vmatprep.subr.mxu0 0.0
  %97 = vmatpush1.msra.mxu0 0.0
  %98 = vmatprep.subr.mxu0 0.0
  %99 = vmatpush1.msra.mxu0 0.0
  %100 = vmatprep.subr.mxu0 0.0
  %101 = vmatpush1.msra.mxu0 0.0
  %102 = vmatprep.subr.mxu0 0.0
  %103 = vmatpush1.msra.mxu0 0.0
  %104 = vmatprep.subr.mxu0 0.0
  %105 = vmatpush1.msra.mxu0 0.0
  %106 = vmatprep.subr.mxu0 0.0
  %107 = vmatpush1.msra.mxu0 0.0
  %108 = vmatprep.mubr.f32.mxu0 0.0
  %109 = vmatmul.mubr.f32.gmra.mrb[0].mxu0 %v39
  %v110 = vpop.f32.mrb[0].mxu0
  %v111 = vadd.f32 %v35, %v110
  %v112 = vpop.f32.mrb[0].mxu0
  %113 = vmatprep.mubr.f32.mxu0 0.0
  %114 = vmatmul.mubr.f32.gmra.mrb[0].mxu0 %v42
  %v115 = vpop.f32.mrb[0].mxu0
  %v116 = vadd.f32 %v35, %v115
  %v117 = vpop.f32.mrb[0].mxu0
  %118 = vdwg.mxu0
  %v119 = vmax.f32 %v111, 0.0
  %v120 = vmax.f32 %v116, 0.0
  %v121 = vld [vmem:[%s3] sm:$0xff]
  %v122 = vld [vmem:[%s3 + $0x8] sm:$0xff]
  %v123 = vld [vmem:[%s3 + $0x10] sm:$0xff]
  %v124 = vld [vmem:[%s3 + $0x18] sm:$0xff]
  %v125 = vld [vmem:[%s3 + $0x20] sm:$0xff]
  %v126 = vld [vmem:[%s3 + $0x28] sm:$0xff]
  %v127 = vld [vmem:[%s3 + $0x30] sm:$0xff]
  %v128 = vld [vmem:[%s3 + $0x38] sm:$0xff]
  %v129 = vld [vmem:[%s3 + $0x40] sm:$0xff]
  %v130 = vld [vmem:[%s3 + $0x48] sm:$0xff]
  %v131 = vld [vmem:[%s3 + $0x50] sm:$0xff]
  %v132 = vld [vmem:[%s3 + $0x58] sm:$0xff]
  %v133 = vld [vmem:[%s3 + $0x60] sm:$0xff]
  %v134 = vld [vmem:[%s3 + $0x68] sm:$0xff]
  %v135 = vld [vmem:[%s3 + $0x70] sm:$0xff]
  %v136 = vld [vmem:[%s3 + $0x78] sm:$0xff]
  %v137 = vld [vmem:[%s4] sm:$0x1]
  %v139 = vlaneseq
  %v140 = vshrl.u32 %v139, 7
  %v141 = vsub.s32 0, %v140
  %v142 = vrot.slane %v137, %v141
  %144 = vmatprep.subr.mxu0 0.0
  %145 = vmatpush1.msra.mxu0 %v121
  %146 = vmatprep.subr.mxu0 0.0
  %147 = vmatpush1.msra.mxu0 %v122
  %148 = vmatprep.subr.mxu0 0.0
  %149 = vmatpush1.msra.mxu0 %v123
  %150 = vmatprep.subr.mxu0 0.0
  %151 = vmatpush1.msra.mxu0 %v124
  %152 = vmatprep.subr.mxu0 0.0
  %153 = vmatpush1.msra.mxu0 %v125
  %154 = vmatprep.subr.mxu0 0.0
  %155 = vmatpush1.msra.mxu0 %v126
  %156 = vmatprep.subr.mxu0 0.0
  %157 = vmatpush1.msra.mxu0 %v127
  %158 = vmatprep.subr.mxu0 0.0
  %159 = vmatpush1.msra.mxu0 %v128
  %160 = vmatprep.subr.mxu0 0.0
  %161 = vmatpush1.msra.mxu0 %v129
  %162 = vmatprep.subr.mxu0 0.0
  %163 = vmatpush1.msra.mxu0 %v130
  %164 = vmatprep.subr.mxu0 0.0
  %165 = vmatpush1.msra.mxu0 %v131
  %166 = vmatprep.subr.mxu0 0.0
  %167 = vmatpush1.msra.mxu0 %v132
  %168 = vmatprep.subr.mxu0 0.0
  %169 = vmatpush1.msra.mxu0 %v133
  %170 = vmatprep.subr.mxu0 0.0
  %171 = vmatpush1.msra.mxu0 %v134
  %172 = vmatprep.subr.mxu0 0.0
  %173 = vmatpush1.msra.mxu0 %v135
  %174 = vmatprep.subr.mxu0 0.0
  %175 = vmatpush1.msra.mxu0 %v136
  %176 = vmatprep.subr.mxu0 0.0
  %177 = vmatpush1.msra.mxu0 0.0
  %178 = vmatprep.subr.mxu0 0.0
  %179 = vmatpush1.msra.mxu0 0.0
  %180 = vmatprep.subr.mxu0 0.0
  %181 = vmatpush1.msra.mxu0 0.0
  %182 = vmatprep.subr.mxu0 0.0
  %183 = vmatpush1.msra.mxu0 0.0
  %184 = vmatprep.subr.mxu0 0.0
  %185 = vmatpush1.msra.mxu0 0.0
  %186 = vmatprep.subr.mxu0 0.0
  %187 = vmatpush1.msra.mxu0 0.0
  %188 = vmatprep.subr.mxu0 0.0
  %189 = vmatpush1.msra.mxu0 0.0
  %190 = vmatprep.subr.mxu0 0.0
  %191 = vmatpush1.msra.mxu0 0.0
  %192 = vmatprep.subr.mxu0 0.0
  %193 = vmatpush1.msra.mxu0 0.0
  %194 = vmatprep.subr.mxu0 0.0
  %195 = vmatpush1.msra.mxu0 0.0
  %196 = vmatprep.subr.mxu0 0.0
  %197 = vmatpush1.msra.mxu0 0.0
  %198 = vmatprep.subr.mxu0 0.0
  %199 = vmatpush1.msra.mxu0 0.0
  %200 = vmatprep.subr.mxu0 0.0
  %201 = vmatpush1.msra.mxu0 0.0
  %202 = vmatprep.subr.mxu0 0.0
  %203 = vmatpush1.msra.mxu0 0.0
  %204 = vmatprep.subr.mxu0 0.0
  %205 = vmatpush1.msra.mxu0 0.0
  %206 = vmatprep.subr.mxu0 0.0
  %207 = vmatpush1.msra.mxu0 0.0
  %208 = vmatprep.mubr.f32.mxu0 0.0
  %209 = vmatmul.mubr.f32.gmra.mrb[0].mxu0 %v119
  %v210 = vpop.f32.mrb[0].mxu0
  %v211 = vadd.f32 %v142, %v210
  %v212 = vpop.f32.mrb[0].mxu0
  %213 = vmatprep.mubr.f32.mxu0 0.0
  %214 = vmatmul.mubr.f32.gmra.mrb[0].mxu0 %v120
  %v215 = vpop.f32.mrb[0].mxu0
  %v216 = vadd.f32 %v142, %v215
  %v217 = vpop.f32.mrb[0].mxu0
  %218 = vdwg.mxu0
  %219 = vst [vmem:[%s5] sm:$0xff] %v211
  %220 = vst [vmem:[%s5 + $0x8] sm:$0xff] %v216
  // Predicated region
  $region22: #{apply.1} parent=0 // pred_check
    _
  $region23: #{apply.1} parent=0 // pred_check_branch
    %222 = sbr.rel (0) target = $region25
  $region24: #{apply.1} parent=0 // pred_region
    _
  $region25: #{apply.1} parent=0 // pred_fallthru
    _
  // Predicated region
  $region26: #{apply.1} parent=0 // pred_check
    _
  $region27: #{apply.1} parent=0 // pred_check_branch
    %224 = sbr.rel (0) target = $region29
  $region28: #{apply.1} parent=0 // pred_region
    _
  $region29: #{apply.1} parent=0 // pred_fallthru
    _

</llo_original>
